<compile_context>
chip_gen: v7x
topology: tpu7x:2x2x1
jax: 0.10.0
libtpu: 0.0.40
codegen_flags: <defaults>
</compile_context>

<pallas_src>
import math

import jax
import jax.numpy as jnp
from jax.experimental import pallas as pl
from jax.experimental.pallas import tpu as pltpu


def _round_up(x, m):
    return ((x + m - 1) // m) * m


def _vmem_capacity_bytes():
    try:
        return int(pltpu.get_tpu_info().vmem_capacity_bytes)
    except Exception:
        return 64 * 1024 * 1024  # v7x per-TensorCore size: safe lower bound everywhere


def make_ffn_kernel(tf_eff, n_ff, weights_resident, approximate_gelu):
    inv_sqrt2 = float(1.0 / math.sqrt(2.0))
    tanh_c = float(math.sqrt(2.0 / math.pi))

    def kernel(x_ref, w1_ref, b1_ref, w2_ref, b2_ref, o_ref, acc_ref):
        # x_ref : (tm, d_model)                     compute dtype
        # w1_ref: (d_model, dff_pad or tf_eff)      compute dtype
        # b1_ref: (1, dff_pad)                      f32 (resident)
        # w2_ref: (dff_pad or tf_eff, d_model)      compute dtype
        # b2_ref: (1, d_model)                      f32 (resident)
        # o_ref : (tm, d_model)                     output dtype
        # acc   : (tm, d_model)                     f32 scratch, persists over j
        j = pl.program_id(1)

        @pl.when(j == 0)
        def _():
            # Fold the fc2 bias into the accumulator init so the final step is a
            # pure cast + store (keeps the epilogue off the critical path).
            acc_ref[...] = jnp.broadcast_to(b2_ref[...], acc_ref.shape)

        if n_ff > 1:
            off = pl.multiple_of(j * tf_eff, 128)
            b1_blk = b1_ref[:, pl.ds(off, tf_eff)]
            if weights_resident:
                w1_blk = w1_ref[:, pl.ds(off, tf_eff)]
                w2_blk = w2_ref[pl.ds(off, tf_eff), :]
            else:
                w1_blk = w1_ref[...]
                w2_blk = w2_ref[...]
        else:
            b1_blk = b1_ref[...]
            w1_blk = w1_ref[...]
            w2_blk = w2_ref[...]

        # fc1 partial: (tm, tf), f32 MXU accumulation.
        h = jnp.dot(x_ref[...], w1_blk, preferred_element_type=jnp.float32)
        h = h + b1_blk

        if approximate_gelu:
            # tanh approximation (EUP tanh slot instead of a long VALU erf polynomial).
            h = 0.5 * h * (1.0 + jnp.tanh(tanh_c * (h + 0.044715 * (h * h * h))))
        else:
            # Exact GELU: 0.5*x*(1+erf(x/sqrt(2))) -- matches torch F.gelu default.
            h = 0.5 * h * (1.0 + jax.lax.erf(h * inv_sqrt2))

        # fc2 partial-sum into the resident f32 accumulator.
        acc_ref[...] += jnp.dot(
            h.astype(w2_blk.dtype), w2_blk, preferred_element_type=jnp.float32
        )

        @pl.when(j == pl.num_programs(1) - 1)
        def _():
            o_ref[...] = acc_ref[...].astype(o_ref.dtype)

    return kernel


def poswise_feed_forward(
    x, w1, b1, w2, b2, *,
    tm=None, tf=512, compute_dtype=None,
    weights_resident=None, approximate_gelu=False,
):
    """x: [batch, seq, d_model] -> [batch, seq, d_model].

    w1: (d_model, d_ff), b1: (d_ff,), w2: (d_ff, d_model), b2: (d_model,).
    compute_dtype: optional matmul-operand dtype (jnp.bfloat16 recommended for
      throughput on v5e/v6e/v7x); bias add, GELU and accumulation stay f32.
      Default None keeps x.dtype (exact f32 semantics of the PyTorch module).
    weights_resident: None = auto (resident iff they fit the VMEM budget).
    """
    batch, seq, d_model = x.shape
    d_ff = w1.shape[1]
    out_dtype = x.dtype
    M = batch * seq

    cdt = jnp.dtype(compute_dtype) if compute_dtype is not None else jnp.dtype(x.dtype)
    in_bytes = cdt.itemsize
    out_bytes = jnp.dtype(out_dtype).itemsize

    usable = int(0.85 * _vmem_capacity_bytes())

    # ---- d_ff tile: prefer a divisor of d_ff (no weight pad/copy); 256-multiples
    # first (fills the 2x256x256 MXUs on v6e/v7x), then 128-multiples, else pad. ----
    if d_ff <= tf:
        tf_eff, dff_pad = d_ff, d_ff
    else:
        tf_eff = 0
        for step in (256, 128):
            cand = (tf // step) * step
            while cand >= step:
                if d_ff % cand == 0:
                    tf_eff = cand
                    break
                cand -= step
            if tf_eff:
                break
        if tf_eff:
            dff_pad = d_ff
        else:
            tf_eff = _round_up(min(tf, d_ff), 128)
            dff_pad = _round_up(d_ff, tf_eff)
    n_ff = dff_pad // tf_eff

    # ---- weight residency: DMA w1/w2 once per call instead of once per row tile ----
    w_bytes_2buf = 2 * 2 * d_model * dff_pad * in_bytes  # both weights, double-buffered
    if weights_resident is None:
        weights_resident = w_bytes_2buf <= usable // 2

    # ---- row tile: large when streaming weights (roofline), VMEM-bounded ----
    tm_target = tm if tm is not None else (512 if weights_resident else 1024)
    tm_eff = min(_round_up(tm_target, 8), _round_up(M, 8))
    M_pad = _round_up(M, tm_eff)
    # Keep >= 2 row tiles when possible so the "parallel" axis can shard across
    # v7x's two TensorCores.
    if M_pad // tm_eff < 2 and tm_eff > 8:
        tm_eff = _round_up(max(tm_eff // 2, 8), 8)
        M_pad = _round_up(M, tm_eff)

    def est_bytes(tm_b, resident):
        e = 2 * tm_b * d_model * in_bytes       # x tiles (double-buffered)
        e += 2 * tm_b * d_model * out_bytes     # output tiles
        e += tm_b * d_model * 4                 # f32 accumulator scratch
        e += 2 * tm_b * tf_eff * 4              # GELU intermediate + elementwise temps
        e += 2 * (dff_pad + d_model) * 4        # b1 / b2 (f32)
        if resident:
            e += 2 * 2 * d_model * dff_pad * in_bytes
        else:
            e += 2 * 2 * d_model * tf_eff * in_bytes
        return e

    # Shrink the row tile if the VMEM budget would be exceeded; as a last resort
    # drop weight residency and keep streaming d_ff slabs.
    while est_bytes(tm_eff, weights_resident) > usable:
        if tm_eff > 64:
            tm_eff = _round_up(tm_eff // 2, 8)
        elif weights_resident:
            weights_resident = False
        elif tm_eff > 8:
            tm_eff = _round_up(tm_eff // 2, 8)
        else:
            break
    M_pad = _round_up(M, tm_eff)

    # ---- operand preparation (padding only when strictly necessary) ----
    x2d = x.reshape(M, d_model).astype(cdt)
    if M_pad != M:
        x2d = jnp.pad(x2d, ((0, M_pad - M), (0, 0)))

    w1c = w1.astype(cdt)
    w2c = w2.astype(cdt)
    b1_2d = b1.reshape(1, d_ff).astype(jnp.float32)
    b2_2d = b2.reshape(1, d_model).astype(jnp.float32)
    if dff_pad != d_ff:
        # Padded w1 columns / b1 entries are zero -> gelu(0)=0 activations hit
        # zero w2 rows, so the padded reduction steps contribute exactly 0.
        w1c = jnp.pad(w1c, ((0, 0), (0, dff_pad - d_ff)))
        b1_2d = jnp.pad(b1_2d, ((0, 0), (0, dff_pad - d_ff)))
        w2c = jnp.pad(w2c, ((0, dff_pad - d_ff), (0, 0)))

    if weights_resident:
        # Constant block index => DMA'd once for the whole grid; kernel slices.
        w1_spec = pl.BlockSpec((d_model, dff_pad), lambda i, j: (0, 0))
        w2_spec = pl.BlockSpec((dff_pad, d_model), lambda i, j: (0, 0))
    else:
        w1_spec = pl.BlockSpec((d_model, tf_eff), lambda i, j: (0, j))
        w2_spec = pl.BlockSpec((tf_eff, d_model), lambda i, j: (j, 0))

    est = est_bytes(tm_eff, weights_resident)
    vmem_limit = int(min(max(int(est * 1.5), 32 * 1024 * 1024), usable))

    grid = (M_pad // tm_eff, n_ff)
    kernel = make_ffn_kernel(tf_eff, n_ff, weights_resident, approximate_gelu)

    out2d = pl.pallas_call(
        kernel,
        out_shape=jax.ShapeDtypeStruct((M_pad, d_model), out_dtype),
        grid_spec=pltpu.PrefetchScalarGridSpec(
            num_scalar_prefetch=0,
            grid=grid,
            in_specs=[
                pl.BlockSpec((tm_eff, d_model), lambda i, j: (i, 0)),  # x rows
                w1_spec,                                               # w1
                pl.BlockSpec((1, dff_pad), lambda i, j: (0, 0)),       # b1 (resident)
                w2_spec,                                               # w2
                pl.BlockSpec((1, d_model), lambda i, j: (0, 0)),       # b2 (resident)
            ],
            out_specs=pl.BlockSpec((tm_eff, d_model), lambda i, j: (i, 0)),
            scratch_shapes=[pltpu.VMEM((tm_eff, d_model), jnp.float32)],
        ),
        compiler_params=pltpu.CompilerParams(
            dimension_semantics=("parallel", "arbitrary"),
            vmem_limit_bytes=vmem_limit,
        ),
    )(x2d, w1c, b1_2d, w2c, b2_2d)

    if M_pad != M:
        out2d = out2d[:M]
    return out2d.reshape(batch, seq, d_model)


def init_params(key, d_model, d_ff, dtype=jnp.float32):
    """Deterministic init matching nn.Linear's U(-1/sqrt(fan_in), 1/sqrt(fan_in))."""
    k1, k2, k3, k4 = jax.random.split(key, 4)
    bound1 = 1.0 / math.sqrt(d_model)
    bound2 = 1.0 / math.sqrt(d_ff)
    # Stored as (in, out) so the kernel does x @ w (== x @ W.T in PyTorch terms).
    w1 = jax.random.uniform(k1, (d_model, d_ff), dtype, -bound1, bound1)
    b1 = jax.random.uniform(k2, (d_ff,), dtype, -bound1, bound1)
    w2 = jax.random.uniform(k3, (d_ff, d_model), dtype, -bound2, bound2)
    b2 = jax.random.uniform(k4, (d_model,), dtype, -bound2, bound2)
    return w1, b1, w2, b2


def _reference(x, w1, b1, w2, b2, approximate=False):
    h = x @ w1 + b1
    if approximate:
        c = math.sqrt(2.0 / math.pi)
        h = 0.5 * h * (1.0 + jnp.tanh(c * (h + 0.044715 * h**3)))
    else:
        h = 0.5 * h * (1.0 + jax.lax.erf(h / jnp.sqrt(2.0)))
    return h @ w2 + b2


if __name__ == "__main__":
    key = jax.random.PRNGKey(0)

    def run_case(batch, seq, d_model, d_ff, kcase, atol, rtol,
                 approximate_gelu=False, **kw):
        kx, kp = jax.random.split(kcase)
        x = jax.random.normal(kx, (batch, seq, d_model), dtype=jnp.float32)
        w1, b1, w2, b2 = init_params(kp, d_model, d_ff)
        out = poswise_feed_forward(x, w1, b1, w2, b2,
                                   approximate_gelu=approximate_gelu, **kw)
        jax.block_until_ready(out)
        out_ref = _reference(x, w1, b1, w2, b2, approximate=approximate_gelu)
        assert out.shape == (batch, seq, d_model)
        err = float(jnp.max(jnp.abs(out - out_ref)))
        assert jnp.allclose(out, out_ref, atol=atol, rtol=rtol), err

    keys = jax.random.split(key, 7)
    # Small toy config (d_model/d_ff stand-ins for the pickled meta values).
    run_case(2, 8, 32, 64, keys[0], 5e-4, 5e-4)
    # Non-divisible row count -> exercises row padding path.
    run_case(2, 7, 32, 48, keys[1], 5e-4, 5e-4)
    # d_ff > tf and not divisible -> exercises d_ff zero-padding + in-kernel slicing.
    run_case(2, 8, 64, 192, keys[2], 5e-4, 5e-4, tf=128)
    # Moderate config -> resident weights, tf_eff=512, two reduction steps, two row tiles.
    run_case(2, 64, 256, 1024, keys[3], 1e-2, 1e-2)
    # Same config with streamed weight slabs (forces the non-resident path).
    run_case(2, 64, 256, 1024, keys[4], 1e-2, 1e-2, weights_resident=False)
    # bf16 compute path (f32 bias/GELU/accumulation preserved) -> looser tolerance.
    run_case(2, 8, 32, 64, keys[5], 5e-2, 5e-2, compute_dtype=jnp.bfloat16)
    # tanh-approx GELU path (EUP transcendental instead of the erf VALU polynomial).
    run_case(2, 8, 32, 64, keys[6], 5e-4, 5e-4, approximate_gelu=True)

    print("KERNEL_OK")
</pallas_src>

<mosaic_0001>
module attributes {stable_mosaic.version = 11 : i64} {
  func.func @kernel(%arg0: i32, %arg1: i32, %arg2: memref<8x32xf32, #tpu.memory_space<vmem>>, %arg3: memref<32x64xf32, #tpu.memory_space<vmem>>, %arg4: memref<1x64xf32, #tpu.memory_space<vmem>>, %arg5: memref<64x32xf32, #tpu.memory_space<vmem>>, %arg6: memref<1x32xf32, #tpu.memory_space<vmem>>, %arg7: memref<8x32xf32, #tpu.memory_space<vmem>>, %arg8: memref<8x32xf32, #tpu.memory_space<vmem>>) attributes {dimension_semantics = [#tpu.dimension_semantics<parallel>, #tpu.dimension_semantics<arbitrary>], iteration_bounds = array<i64: 2, 1>, scalar_prefetch = 0 : i64, scratch_operands = 1 : i64, tpu.core_type = #tpu.core_type<tc>, window_params = [{transform_indices = @transform_0, window_bounds = array<i64: 8, 32>}, {pipeline_mode = #tpu.pipeline_mode<synchronous>, transform_indices = @transform_1, window_bounds = array<i64: 32, 64>}, {pipeline_mode = #tpu.pipeline_mode<synchronous>, transform_indices = @transform_2, window_bounds = array<i64: 1, 64>}, {pipeline_mode = #tpu.pipeline_mode<synchronous>, transform_indices = @transform_3, window_bounds = array<i64: 64, 32>}, {pipeline_mode = #tpu.pipeline_mode<synchronous>, transform_indices = @transform_4, window_bounds = array<i64: 1, 32>}, {transform_indices = @transform_5, window_bounds = array<i64: 8, 32>}]} {
    %c0_i32 = arith.constant 0 : i32
    %0 = arith.cmpi eq, %arg1, %c0_i32 : i32
    %1 = arith.extui %0 : i1 to i32
    %c0_i32_0 = arith.constant 0 : i32
    %2 = arith.cmpi ne, %1, %c0_i32_0 : i32
    scf.if %2 {
      %c0_18 = arith.constant 0 : index
      %c0_19 = arith.constant 0 : index
      %25 = vector.load %arg6[%c0_18, %c0_19] : memref<1x32xf32, #tpu.memory_space<vmem>>, vector<1x32xf32>
      %26 = vector.shape_cast %25 : vector<1x32xf32> to vector<1x32xf32>
      %27 = vector.broadcast %26 : vector<1x32xf32> to vector<8x32xf32>
      %c0_20 = arith.constant 0 : index
      %c0_21 = arith.constant 0 : index
      %28 = vector.load %arg8[%c0_20, %c0_21] : memref<8x32xf32, #tpu.memory_space<vmem>>, vector<8x32xf32>
      tpu.vector_store %arg8[%c0_20, %c0_21], %27 {strides = array<i32>} : memref<8x32xf32, #tpu.memory_space<vmem>>, vector<8x32xf32>,
    } else {
    }
    %c0 = arith.constant 0 : index
    %c0_1 = arith.constant 0 : index
    %3 = vector.load %arg4[%c0, %c0_1] : memref<1x64xf32, #tpu.memory_space<vmem>>, vector<1x64xf32>
    %c0_2 = arith.constant 0 : index
    %c0_3 = arith.constant 0 : index
    %4 = vector.load %arg3[%c0_2, %c0_3] : memref<32x64xf32, #tpu.memory_space<vmem>>, vector<32x64xf32>
    %c0_4 = arith.constant 0 : index
    %c0_5 = arith.constant 0 : index
    %5 = vector.load %arg5[%c0_4, %c0_5] : memref<64x32xf32, #tpu.memory_space<vmem>>, vector<64x32xf32>
    %c0_6 = arith.constant 0 : index
    %c0_7 = arith.constant 0 : index
    %6 = vector.load %arg2[%c0_6, %c0_7] : memref<8x32xf32, #tpu.memory_space<vmem>>, vector<8x32xf32>
    %cst = arith.constant dense<0.000000e+00> : vector<8x64xf32>
    %7 = tpu.matmul %6, %4, %cst {dimension_numbers = #tpu.dot_dimension_numbers<[1], [0], [0], [1], [0, 0, 1, 1], [], []>} : vector<8x32xf32>, vector<32x64xf32>, vector<8x64xf32> -> vector<8x64xf32>
    %8 = vector.broadcast %3 : vector<1x64xf32> to vector<8x64xf32>
    %9 = arith.addf %7, %8 : vector<8x64xf32>
    %cst_8 = arith.constant 5.000000e-01 : f32
    %10 = vector.broadcast %cst_8 : f32 to vector<8x64xf32>
    %11 = arith.mulf %10, %9 : vector<8x64xf32>
    %cst_9 = arith.constant 0.707106769 : f32
    %12 = vector.broadcast %cst_9 : f32 to vector<8x64xf32>
    %13 = arith.mulf %9, %12 : vector<8x64xf32>
    %14 = math.erf %13 : vector<8x64xf32>
    %cst_10 = arith.constant 1.000000e+00 : f32
    %15 = vector.broadcast %cst_10 : f32 to vector<8x64xf32>
    %16 = arith.addf %15, %14 : vector<8x64xf32>
    %17 = arith.mulf %11, %16 : vector<8x64xf32>
    %c0_11 = arith.constant 0 : index
    %c0_12 = arith.constant 0 : index
    %18 = vector.load %arg8[%c0_11, %c0_12] : memref<8x32xf32, #tpu.memory_space<vmem>>, vector<8x32xf32>
    %cst_13 = arith.constant dense<0.000000e+00> : vector<8x32xf32>
    %19 = tpu.matmul %17, %5, %cst_13 {dimension_numbers = #tpu.dot_dimension_numbers<[1], [0], [0], [1], [0, 0, 1, 1], [], []>} : vector<8x64xf32>, vector<64x32xf32>, vector<8x32xf32> -> vector<8x32xf32>
    %20 = arith.addf %18, %19 : vector<8x32xf32>
    %c0_14 = arith.constant 0 : index
    %c0_15 = arith.constant 0 : index
    %21 = vector.load %arg8[%c0_14, %c0_15] : memref<8x32xf32, #tpu.memory_space<vmem>>, vector<8x32xf32>
    tpu.vector_store %arg8[%c0_14, %c0_15], %20 {strides = array<i32>} : memref<8x32xf32, #tpu.memory_space<vmem>>, vector<8x32xf32>,
    %c0_i32_16 = arith.constant 0 : i32
    %22 = arith.cmpi eq, %arg1, %c0_i32_16 : i32
    %23 = arith.extui %22 : i1 to i32
    %c0_i32_17 = arith.constant 0 : i32
    %24 = arith.cmpi ne, %23, %c0_i32_17 : i32
    scf.if %24 {
      %c0_18 = arith.constant 0 : index
      %c0_19 = arith.constant 0 : index
      %25 = vector.load %arg8[%c0_18, %c0_19] : memref<8x32xf32, #tpu.memory_space<vmem>>, vector<8x32xf32>
      %c0_20 = arith.constant 0 : index
      %c0_21 = arith.constant 0 : index
      %26 = vector.load %arg7[%c0_20, %c0_21] : memref<8x32xf32, #tpu.memory_space<vmem>>, vector<8x32xf32>
      tpu.vector_store %arg7[%c0_20, %c0_21], %25 {strides = array<i32>} : memref<8x32xf32, #tpu.memory_space<vmem>>, vector<8x32xf32>,
    } else {
    }
    return
  }
  func.func @transform_0(%arg0: i32, %arg1: i32) -> (i32, i32) {
    %c0_i32 = arith.constant 0 : i32
    %c0_i32_0 = arith.constant 0 : i32
    return %arg0, %c0_i32 : i32, i32
  }
  func.func @transform_1(%arg0: i32, %arg1: i32) -> (i32, i32) {
    %c0_i32 = arith.constant 0 : i32
    %c0_i32_0 = arith.constant 0 : i32
    %c0_i32_1 = arith.constant 0 : i32
    return %c0_i32, %c0_i32_0 : i32, i32
  }
  func.func @transform_2(%arg0: i32, %arg1: i32) -> (i32, i32) {
    %c0_i32 = arith.constant 0 : i32
    %c0_i32_0 = arith.constant 0 : i32
    %c0_i32_1 = arith.constant 0 : i32
    return %c0_i32, %c0_i32_0 : i32, i32
  }
  func.func @transform_3(%arg0: i32, %arg1: i32) -> (i32, i32) {
    %c0_i32 = arith.constant 0 : i32
    %c0_i32_0 = arith.constant 0 : i32
    %c0_i32_1 = arith.constant 0 : i32
    return %c0_i32, %c0_i32_0 : i32, i32
  }
  func.func @transform_4(%arg0: i32, %arg1: i32) -> (i32, i32) {
    %c0_i32 = arith.constant 0 : i32
    %c0_i32_0 = arith.constant 0 : i32
    %c0_i32_1 = arith.constant 0 : i32
    return %c0_i32, %c0_i32_0 : i32, i32
  }
  func.func @transform_5(%arg0: i32, %arg1: i32) -> (i32, i32) {
    %c0_i32 = arith.constant 0 : i32
    %c0_i32_0 = arith.constant 0 : i32
    return %arg0, %c0_i32 : i32, i32
  }
}

</mosaic_0001>

<llo_original>
// kernel: tpu_custom_call.1
$region0: #{tpu_custom_call.1}
  #allocation0 [shape = 'u32[]', space=smem, size = 0x4, offset = 0x4, fixed_abs, tag = 'smem constant byte address 0x4 - core index']
  #allocation1 [shape = 'u32[144,128]{1,0:T(1,128)}', space=vmem, size = 0x12000, scoped, tag = 'internal scratch']
  #allocation2 [shape = 'f32[8,32]{1,0:T(8,128)}', space=vmem, size = 0x1000, scoped, tag = 'scratch operand']
  %s0 = inlined_call_operand.vmem [shape: f32[16,32], index: 0, kind: input, shape index: {}]
  %s1 = inlined_call_operand.vmem [shape: f32[32,64], index: 1, kind: input, shape index: {}]
  %s2 = inlined_call_operand.vmem [shape: f32[1,64], index: 2, kind: input, shape index: {}]
  %s3 = inlined_call_operand.vmem [shape: f32[64,32], index: 3, kind: input, shape index: {}]
  %s4 = inlined_call_operand.vmem [shape: f32[1,32], index: 4, kind: input, shape index: {}]
  %s5 = inlined_call_operand.hbm [shape: f32[16,32], index: 5, kind: output, shape index: {}]
  %s6 = sld [smem:[#allocation0]]
  $region61: #{tpu_custom_call.1} parent=0
    _
  %s8 = ssub.s32 1, %s6
  %s9 = scalar_select 0, %s8, %s6
  $region1: #{tpu_custom_call.1} parent=0
    #allocation3 [shape = 'u8[8192]{0}', space=vmem, size = 0x2000, scoped, tag = 'output window, operand 0']
    #allocation4 [shape = 's32[2]{0}', space=sflag, size = 0x8, scoped, tag = 'scoped memory for tpu_custom_call.1']
    %10 = vsyncpa [#allocation4], 0
    %s11 = scalar_lea.sflag [#allocation4], 1
    %12 = vsyncpa %s11, 0
    loop: start=0, step=1, limit=4
    $region2: #{tpu_custom_call.1} parent=1 // loop_pre_header
      _
    $region3: #{tpu_custom_call.1} parent=1 // loop_header
      %s14 = sphi 0, %s18
      %p15 = scmp.ge.s32.totalorder %s14, 4
      %s21 = sphi 0, %s33
      %s22 = sphi 0, %s29
      %s23 = sphi 0, %s21
      %s24 = sphi 0, %s22
      %s25 = sphi 0, %s23
      %s26 = sphi 0, %s24
      %s36 = sphi 0, %s38
      %s39 = sphi 0, %s36
      %s40 = sphi 0, %s39
      %s56 = sphi 0, %s40
      %s60 = sphi 0, %s60
      %s62 = sphi 0, %s60
      %s63 = sphi 0, %s62
      %s77 = sphi 0, %s63
      %s81 = sphi 0, %s81
      %s83 = sphi 0, %s81
      %s84 = sphi 0, %s83
      %s98 = sphi 0, %s84
      %s102 = sphi 0, %s102
      %s104 = sphi 0, %s102
      %s105 = sphi 0, %s104
      %s119 = sphi 0, %s105
      %s123 = sphi 0, %s123
      %s125 = sphi 0, %s123
      %s126 = sphi 0, %s125
      %s140 = sphi 0, %s126
      %s146 = sphi 0, %s148
      %s149 = sphi 0, %s146
      %s150 = sphi 0, %s149
      %s166 = sphi 0, %s150
    $region4: #{tpu_custom_call.1} parent=1 // loop_header_branch
      %17 = sbr.rel (%p15) target = $region8
    $region5: #{tpu_custom_call.1} parent=1 // loop_body
      %s19 = ssub.s32 %s14, 1
      %s20 = ssub.s32 %s14, 2
      %s27 = sadd.s32 1, %s22
      %p28 = scmp.ge.s32.totalorder %s27, 1
      %s29 = scalar_select %p28, 0, %s27
      %s30 = sadd.s32 1, %s21
      %s31 = scalar_select %p28, %s30, %s21
      %p32 = scmp.ge.s32.totalorder %s31, 2
      %s33 = scalar_select %p32, 0, %s31
      %s34 = ssub.s32 %s21, %s33
      %p35 = scmp.eq.s32.totalorder %s34, 0
      %s37 = sadd.s32 %s36, 1
      %s38 = scalar_select %p35, %s36, %s37
      %p41 = pneg %p35
      %p42 = scmp.eq.s32.totalorder %s14, 1
      %p43 = por %p41, %p42
      %p44 = scmp.ne.s32.totalorder %s36, %s39
      %p45 = scmp.eq.s32.totalorder %s14, 0
      %p46 = por %p44, %p45
      %p47 = scmp.ne.s32.totalorder %s36, %s39
      %p48 = scmp.eq.s32.totalorder %s19, 1
      %p49 = por %p47, %p48
      %p50 = scmp.ne.s32.totalorder %s39, %s40
      %p51 = scmp.eq.s32.totalorder %s19, 0
      %p52 = por %p50, %p51
      %p53 = scmp.ne.s32.totalorder %s39, %s40
      %p54 = scmp.eq.s32.totalorder %s20, 1
      %p55 = por %p53, %p54
      %p57 = scmp.ne.s32.totalorder %s40, %s56
      %p58 = scmp.eq.s32.totalorder %s20, 0
      %p59 = por %p57, %p58
      %s61 = sadd.s32 %s60, 1
      %p64 = scmp.eq.s32.totalorder %s14, 1
      %p65 = scmp.ne.s32.totalorder %s60, %s62
      %p66 = scmp.eq.s32.totalorder %s14, 0
      %p67 = por %p65, %p66
      %p68 = scmp.ne.s32.totalorder %s60, %s62
      %p69 = scmp.eq.s32.totalorder %s19, 1
      %p70 = por %p68, %p69
      %p71 = scmp.ne.s32.totalorder %s62, %s63
      %p72 = scmp.eq.s32.totalorder %s19, 0
      %p73 = por %p71, %p72
      %p74 = scmp.ne.s32.totalorder %s62, %s63
      %p75 = scmp.eq.s32.totalorder %s20, 1
      %p76 = por %p74, %p75
      %p78 = scmp.ne.s32.totalorder %s63, %s77
      %p79 = scmp.eq.s32.totalorder %s20, 0
      %p80 = por %p78, %p79
      %s82 = sadd.s32 %s81, 1
      %p85 = scmp.eq.s32.totalorder %s14, 1
      %p86 = scmp.ne.s32.totalorder %s81, %s83
      %p87 = scmp.eq.s32.totalorder %s14, 0
      %p88 = por %p86, %p87
      %p89 = scmp.ne.s32.totalorder %s81, %s83
      %p90 = scmp.eq.s32.totalorder %s19, 1
      %p91 = por %p89, %p90
      %p92 = scmp.ne.s32.totalorder %s83, %s84
      %p93 = scmp.eq.s32.totalorder %s19, 0
      %p94 = por %p92, %p93
      %p95 = scmp.ne.s32.totalorder %s83, %s84
      %p96 = scmp.eq.s32.totalorder %s20, 1
      %p97 = por %p95, %p96
      %p99 = scmp.ne.s32.totalorder %s84, %s98
      %p100 = scmp.eq.s32.totalorder %s20, 0
      %p101 = por %p99, %p100
      %s103 = sadd.s32 %s102, 1
      %p106 = scmp.eq.s32.totalorder %s14, 1
      %p107 = scmp.ne.s32.totalorder %s102, %s104
      %p108 = scmp.eq.s32.totalorder %s14, 0
      %p109 = por %p107, %p108
      %p110 = scmp.ne.s32.totalorder %s102, %s104
      %p111 = scmp.eq.s32.totalorder %s19, 1
      %p112 = por %p110, %p111
      %p113 = scmp.ne.s32.totalorder %s104, %s105
      %p114 = scmp.eq.s32.totalorder %s19, 0
      %p115 = por %p113, %p114
      %p116 = scmp.ne.s32.totalorder %s104, %s105
      %p117 = scmp.eq.s32.totalorder %s20, 1
      %p118 = por %p116, %p117
      %p120 = scmp.ne.s32.totalorder %s105, %s119
      %p121 = scmp.eq.s32.totalorder %s20, 0
      %p122 = por %p120, %p121
      %s124 = sadd.s32 %s123, 1
      %p127 = scmp.eq.s32.totalorder %s14, 1
      %p128 = scmp.ne.s32.totalorder %s123, %s125
      %p129 = scmp.eq.s32.totalorder %s14, 0
      %p130 = por %p128, %p129
      %p131 = scmp.ne.s32.totalorder %s123, %s125
      %p132 = scmp.eq.s32.totalorder %s19, 1
      %p133 = por %p131, %p132
      %p134 = scmp.ne.s32.totalorder %s125, %s126
      %p135 = scmp.eq.s32.totalorder %s19, 0
      %p136 = por %p134, %p135
      %p137 = scmp.ne.s32.totalorder %s125, %s126
      %p138 = scmp.eq.s32.totalorder %s20, 1
      %p139 = por %p137, %p138
      %p141 = scmp.ne.s32.totalorder %s126, %s140
      %p142 = scmp.eq.s32.totalorder %s20, 0
      %p143 = por %p141, %p142
      %s144 = ssub.s32 %s21, %s33
      %p145 = scmp.eq.s32.totalorder %s144, 0
      %s147 = sadd.s32 %s146, 1
      %s148 = scalar_select %p145, %s146, %s147
      %p151 = pneg %p145
      %p152 = scmp.eq.s32.totalorder %s14, 1
      %p153 = por %p151, %p152
      %p154 = scmp.ne.s32.totalorder %s146, %s149
      %p155 = scmp.eq.s32.totalorder %s14, 0
      %p156 = por %p154, %p155
      %p157 = scmp.ne.s32.totalorder %s146, %s149
      %p158 = scmp.eq.s32.totalorder %s19, 1
      %p159 = por %p157, %p158
      %p160 = scmp.ne.s32.totalorder %s149, %s150
      %p161 = scmp.eq.s32.totalorder %s19, 0
      %p162 = por %p160, %p161
      %p163 = scmp.ne.s32.totalorder %s149, %s150
      %p164 = scmp.eq.s32.totalorder %s20, 1
      %p165 = por %p163, %p164
      %p167 = scmp.ne.s32.totalorder %s150, %s166
      %p168 = scmp.eq.s32.totalorder %s20, 0
      %p169 = por %p167, %p168
      %p170 = scmp.le.s32.totalorder 1, %s14
      %p171 = scmp.lt.s32.totalorder %s14, 3
      %p172 = pnand %p170, %p171
      %p173 = pneg %p172
      // Predicated region
      $region9: #{tpu_custom_call.1} parent=5 // pred_check
        _
      $region10: #{tpu_custom_call.1} parent=5 // pred_check_branch
        %175 = sbr.rel (%p172) target = $region12
      $region11: #{tpu_custom_call.1} parent=5 // pred_region
        %s176 = ssub.s32 %s14, 1
        // Predicated region
        $region13: #{tpu_custom_call.1} parent=11 // pred_check
          %p177 = pneg %p73
        $region14: #{tpu_custom_call.1} parent=11 // pred_check_branch
          %179 = sbr.rel (%p177) target = $region16
        $region15: #{tpu_custom_call.1} parent=11 // pred_region
          _
        $region16: #{tpu_custom_call.1} parent=11 // pred_fallthru
          _
        // Predicated region
        $region17: #{tpu_custom_call.1} parent=11 // pred_check
          %p180 = pneg %p94
        $region18: #{tpu_custom_call.1} parent=11 // pred_check_branch
          %182 = sbr.rel (%p180) target = $region20
        $region19: #{tpu_custom_call.1} parent=11 // pred_region
          _
        $region20: #{tpu_custom_call.1} parent=11 // pred_fallthru
          _
        // Predicated region
        $region21: #{tpu_custom_call.1} parent=11 // pred_check
          %p183 = pneg %p115
        $region22: #{tpu_custom_call.1} parent=11 // pred_check_branch
          %185 = sbr.rel (%p183) target = $region24
        $region23: #{tpu_custom_call.1} parent=11 // pred_region
          _
        $region24: #{tpu_custom_call.1} parent=11 // pred_fallthru
          _
        // Predicated region
        $region25: #{tpu_custom_call.1} parent=11 // pred_check
          %p186 = pneg %p136
        $region26: #{tpu_custom_call.1} parent=11 // pred_check_branch
          %188 = sbr.rel (%p186) target = $region28
        $region27: #{tpu_custom_call.1} parent=11 // pred_region
          _
        $region28: #{tpu_custom_call.1} parent=11 // pred_fallthru
          _
      $region12: #{tpu_custom_call.1} parent=5 // pred_fallthru
        _
      %p189 = scmp.lt.s32.totalorder %s14, 2
      // Predicated region
      $region29: #{tpu_custom_call.1} parent=5 // pred_check
        %p190 = pneg %p189
      $region30: #{tpu_custom_call.1} parent=5 // pred_check_branch
        %192 = sbr.rel (%p190) target = $region32
      $region31: #{tpu_custom_call.1} parent=5 // pred_region
        // Predicated region
        $region33: #{tpu_custom_call.1} parent=31 // pred_check
          %p193 = pneg %p46
        $region34: #{tpu_custom_call.1} parent=31 // pred_check_branch
          %195 = sbr.rel (%p193) target = $region36
        $region35: #{tpu_custom_call.1} parent=31 // pred_region
          %p196 = scmp.lt.s32.totalorder %s21, 1
          %s197 = scalar_select %p196, %s21, 1
          %s198 = smul.addr %s197, 8
          %s199 = scalar_lea.vmem %s0, %s198
        $region36: #{tpu_custom_call.1} parent=31 // pred_fallthru
          _
      $region32: #{tpu_custom_call.1} parent=5 // pred_fallthru
        _
      %p200 = scmp.le.s32.totalorder 1, %s14
      %p201 = scmp.lt.s32.totalorder %s14, 3
      %p202 = pnand %p200, %p201
      %p203 = pneg %p202
      // Predicated region
      $region37: #{tpu_custom_call.1} parent=5 // pred_check
        _
      $region38: #{tpu_custom_call.1} parent=5 // pred_check_branch
        %205 = sbr.rel (%p202) target = $region40
      $region39: #{tpu_custom_call.1} parent=5 // pred_region
        %s206 = ssub.s32 %s14, 1
        %p207 = scmp.lt.s32.totalorder %s23, 1
        %s208 = scalar_select %p207, %s23, 1
        %s209 = smul.addr %s208, 8
        %s210 = scalar_lea.vmem %s0, %s209
        %p211 = pneg %p52
        %p212 = pneg %p49
        %p213 = pneg %p73
        %p214 = pneg %p70
        %p215 = pneg %p94
        %p216 = pneg %p91
        %p217 = pneg %p115
        %p218 = pneg %p112
        %p219 = pneg %p136
        %p220 = pneg %p133
        %p221 = pneg %p162
        %p222 = pneg %p159
        %s223 = sand.u32 %s149, 1
        %s224 = scalar_lea.sflag [#allocation4], %s223
        %s225 = sand.u32 %s149, 1
        %s226 = smul.addr %s225, 8
        %s227 = scalar_lea.vmem [#allocation3], %s226
        %p228 = scmp.lt.s32.totalorder %s23, 1
        %s229 = scalar_select %p228, %s23, 1
        %s230 = smul.addr %s229, 8
        %s231 = scalar_lea.vmem %s0, %s230
        %p232 = scmp.eq.s32.totalorder %s24, 0
        // Predicated region
        $region41: #{tpu_custom_call.1} parent=39 // pred_check
          %p233 = pneg %p232
        $region42: #{tpu_custom_call.1} parent=39 // pred_check_branch
          %235 = sbr.rel (%p233) target = $region44
        $region43: #{tpu_custom_call.1} parent=39 // pred_region
          %v236 = vld [vmem:[%s4] sm:$0x1]
          %v238 = vlaneseq
          %v239 = vshrl.u32 %v238, 7
          %v240 = vsub.s32 0, %v239
          %v241 = vrot.slane %v236, %v240
          %vm243 = vcmask 261120
          %244 = vst.msk [vmem:[#allocation2] sm:$0xff] %vm243, %v241
        $region44: #{tpu_custom_call.1} parent=39 // pred_fallthru
          _
        %v245 = vld [vmem:[%s2] sm:$0x1]
        %v246 = vld [vmem:[%s1] sm:$0xff]
        %v247 = vld [vmem:[%s1 + $0x8] sm:$0xff]
        %v248 = vld [vmem:[%s1 + $0x10] sm:$0xff]
        %v249 = vld [vmem:[%s1 + $0x18] sm:$0xff]
        %v250 = vld [vmem:[%s3] sm:$0xff]
        %v251 = vld [vmem:[%s3 + $0x8] sm:$0xff]
        %v252 = vld [vmem:[%s3 + $0x10] sm:$0xff]
        %v253 = vld [vmem:[%s3 + $0x18] sm:$0xff]
        %v254 = vld [vmem:[%s3 + $0x20] sm:$0xff]
        %v255 = vld [vmem:[%s3 + $0x28] sm:$0xff]
        %v256 = vld [vmem:[%s3 + $0x30] sm:$0xff]
        %v257 = vld [vmem:[%s3 + $0x38] sm:$0xff]
        %v258 = vld [vmem:[%s231] sm:$0xff]
        %v260 = vlaneseq
        %v261 = vshrl.u32 %v260, 7
        %v262 = vsub.s32 0, %v261
        %v263 = vrot.slane %v245, %v262
        %vm265 = vcmask 261120
        %v267 = vsel %vm265, %v258, 0
        %269 = vmatprep.subr.mxu0 0.0
        %270 = vmatpush1.msra.mxu0 %v246
        %271 = vmatprep.subr.mxu0 0.0
        %272 = vmatpush1.msra.mxu0 %v247
        %273 = vmatprep.subr.mxu0 0.0
        %274 = vmatpush1.msra.mxu0 %v248
        %275 = vmatprep.subr.mxu0 0.0
        %276 = vmatpush1.msra.mxu0 %v249
        %277 = vmatprep.subr.mxu0 0.0
        %278 = vmatpush1.msra.mxu0 0.0
        %279 = vmatprep.subr.mxu0 0.0
        %280 = vmatpush1.msra.mxu0 0.0
        %281 = vmatprep.subr.mxu0 0.0
        %282 = vmatpush1.msra.mxu0 0.0
        %283 = vmatprep.subr.mxu0 0.0
        %284 = vmatpush1.msra.mxu0 0.0
        %285 = vmatprep.subr.mxu0 0.0
        %286 = vmatpush1.msra.mxu0 0.0
        %287 = vmatprep.subr.mxu0 0.0
        %288 = vmatpush1.msra.mxu0 0.0
        %289 = vmatprep.subr.mxu0 0.0
        %290 = vmatpush1.msra.mxu0 0.0
        %291 = vmatprep.subr.mxu0 0.0
        %292 = vmatpush1.msra.mxu0 0.0
        %293 = vmatprep.subr.mxu0 0.0
        %294 = vmatpush1.msra.mxu0 0.0
        %295 = vmatprep.subr.mxu0 0.0
        %296 = vmatpush1.msra.mxu0 0.0
        %297 = vmatprep.subr.mxu0 0.0
        %298 = vmatpush1.msra.mxu0 0.0
        %299 = vmatprep.subr.mxu0 0.0
        %300 = vmatpush1.msra.mxu0 0.0
        %301 = vmatprep.subr.mxu0 0.0
        %302 = vmatpush1.msra.mxu0 0.0
        %303 = vmatprep.subr.mxu0 0.0
        %304 = vmatpush1.msra.mxu0 0.0
        %305 = vmatprep.subr.mxu0 0.0
        %306 = vmatpush1.msra.mxu0 0.0
        %307 = vmatprep.subr.mxu0 0.0
        %308 = vmatpush1.msra.mxu0 0.0
        %309 = vmatprep.subr.mxu0 0.0
        %310 = vmatpush1.msra.mxu0 0.0
        %311 = vmatprep.subr.mxu0 0.0
        %312 = vmatpush1.msra.mxu0 0.0
        %313 = vmatprep.subr.mxu0 0.0
        %314 = vmatpush1.msra.mxu0 0.0
        %315 = vmatprep.subr.mxu0 0.0
        %316 = vmatpush1.msra.mxu0 0.0
        %317 = vmatprep.subr.mxu0 0.0
        %318 = vmatpush1.msra.mxu0 0.0
        %319 = vmatprep.subr.mxu0 0.0
        %320 = vmatpush1.msra.mxu0 0.0
        %321 = vmatprep.subr.mxu0 0.0
        %322 = vmatpush1.msra.mxu0 0.0
        %323 = vmatprep.subr.mxu0 0.0
        %324 = vmatpush1.msra.mxu0 0.0
        %325 = vmatprep.subr.mxu0 0.0
        %326 = vmatpush1.msra.mxu0 0.0
        %327 = vmatprep.subr.mxu0 0.0
        %328 = vmatpush1.msra.mxu0 0.0
        %329 = vmatprep.subr.mxu0 0.0
        %330 = vmatpush1.msra.mxu0 0.0
        %331 = vmatprep.subr.mxu0 0.0
        %332 = vmatpush1.msra.mxu0 0.0
        %333 = vmatprep.mubr.f32.mxu0 0.0
        %334 = vmatmul.mubr.f32.gmra.mrb[0].mxu0 %v267
        %v335 = vpop.f32.mrb[0].mxu0
        %v336 = vadd.f32 %v263, %v335
        %v337 = vpop.f32.mrb[0].mxu0
        %338 = vdwg.mxu0
        %v339 = vmul.f32 %v336, 0.5
        %v340 = vmul.f32 %v336, 0.70710677
        %v341 = verf.f32.pop %v340
        %v342 = vadd.f32 %v341, 1.0
        %v343 = vmul.f32 %v339, %v342
        %v344 = vld [vmem:[#allocation2] sm:$0xff]
        %vm345 = vcmask 523264
        %v347 = vsel %vm345, %v343, 0
        %349 = vmatprep.subr.mxu0 0.0
        %350 = vmatpush1.msra.mxu0 %v250
        %351 = vmatprep.subr.mxu0 0.0
        %352 = vmatpush1.msra.mxu0 %v251
        %353 = vmatprep.subr.mxu0 0.0
        %354 = vmatpush1.msra.mxu0 %v252
        %355 = vmatprep.subr.mxu0 0.0
        %356 = vmatpush1.msra.mxu0 %v253
        %357 = vmatprep.subr.mxu0 0.0
        %358 = vmatpush1.msra.mxu0 %v254
        %359 = vmatprep.subr.mxu0 0.0
        %360 = vmatpush1.msra.mxu0 %v255
        %361 = vmatprep.subr.mxu0 0.0
        %362 = vmatpush1.msra.mxu0 %v256
        %363 = vmatprep.subr.mxu0 0.0
        %364 = vmatpush1.msra.mxu0 %v257
        %365 = vmatprep.subr.mxu0 0.0
        %366 = vmatpush1.msra.mxu0 0.0
        %367 = vmatprep.subr.mxu0 0.0
        %368 = vmatpush1.msra.mxu0 0.0
        %369 = vmatprep.subr.mxu0 0.0
        %370 = vmatpush1.msra.mxu0 0.0
        %371 = vmatprep.subr.mxu0 0.0
        %372 = vmatpush1.msra.mxu0 0.0
        %373 = vmatprep.subr.mxu0 0.0
        %374 = vmatpush1.msra.mxu0 0.0
        %375 = vmatprep.subr.mxu0 0.0
        %376 = vmatpush1.msra.mxu0 0.0
        %377 = vmatprep.subr.mxu0 0.0
        %378 = vmatpush1.msra.mxu0 0.0
        %379 = vmatprep.subr.mxu0 0.0
        %380 = vmatpush1.msra.mxu0 0.0
        %381 = vmatprep.subr.mxu0 0.0
        %382 = vmatpush1.msra.mxu0 0.0
        %383 = vmatprep.subr.mxu0 0.0
        %384 = vmatpush1.msra.mxu0 0.0
        %385 = vmatprep.subr.mxu0 0.0
        %386 = vmatpush1.msra.mxu0 0.0
        %387 = vmatprep.subr.mxu0 0.0
        %388 = vmatpush1.msra.mxu0 0.0
        %389 = vmatprep.subr.mxu0 0.0
        %390 = vmatpush1.msra.mxu0 0.0
        %391 = vmatprep.subr.mxu0 0.0
        %392 = vmatpush1.msra.mxu0 0.0
        %393 = vmatprep.subr.mxu0 0.0
        %394 = vmatpush1.msra.mxu0 0.0
        %395 = vmatprep.subr.mxu0 0.0
        %396 = vmatpush1.msra.mxu0 0.0
        %397 = vmatprep.subr.mxu0 0.0
        %398 = vmatpush1.msra.mxu0 0.0
        %399 = vmatprep.subr.mxu0 0.0
        %400 = vmatpush1.msra.mxu0 0.0
        %401 = vmatprep.subr.mxu0 0.0
        %402 = vmatpush1.msra.mxu0 0.0
        %403 = vmatprep.subr.mxu0 0.0
        %404 = vmatpush1.msra.mxu0 0.0
        %405 = vmatprep.subr.mxu0 0.0
        %406 = vmatpush1.msra.mxu0 0.0
        %407 = vmatprep.subr.mxu0 0.0
        %408 = vmatpush1.msra.mxu0 0.0
        %409 = vmatprep.subr.mxu0 0.0
        %410 = vmatpush1.msra.mxu0 0.0
        %411 = vmatprep.subr.mxu0 0.0
        %412 = vmatpush1.msra.mxu0 0.0
        %413 = vmatprep.mubr.f32.mxu0 0.0
        %414 = vmatmul.mubr.f32.gmra.mrb[0].mxu0 %v347
        %v415 = vpop.f32.mrb[0].mxu0
        %v416 = vadd.f32 0.0, %v415
        %v417 = vpop.f32.mrb[0].mxu0
        %418 = vdwg.mxu0
        %v419 = vadd.f32 %v344, %v416
        %420 = vst.msk [vmem:[#allocation2] sm:$0xff] %vm265, %v419
        // Predicated region
        $region45: #{tpu_custom_call.1} parent=39 // pred_check
          %p421 = pneg %p232
        $region46: #{tpu_custom_call.1} parent=39 // pred_check_branch
          %423 = sbr.rel (%p421) target = $region48
        $region47: #{tpu_custom_call.1} parent=39 // pred_region
          %v424 = vld [vmem:[#allocation2] sm:$0xff]
          %425 = vst.msk [vmem:[%s227] sm:$0xff] %vm265, %v424
        $region48: #{tpu_custom_call.1} parent=39 // pred_fallthru
          _
        %s426 = sand.u32 %s149, 1
        %s427 = scalar_lea.sflag [#allocation4], %s426
        %s428 = sand.u32 %s149, 1
        %s429 = smul.addr %s428, 8
        %s430 = scalar_lea.vmem [#allocation3], %s429
        // Predicated region
        $region49: #{tpu_custom_call.1} parent=39 // pred_check
          %p431 = pneg %p159
        $region50: #{tpu_custom_call.1} parent=39 // pred_check_branch
          %433 = sbr.rel (%p431) target = $region52
        $region51: #{tpu_custom_call.1} parent=39 // pred_region
          %s435 = ssub.s32 128, 128
          %436 = vsyncadd %s427, %s435
          %s437 = smul.addr %s23, 128
          %s438 = scalar_lea.hbm %s5, %s437
          %s440 = sshll.u32 %s430, 4
          %s441 = int_to_ptr.vmem [resolvable:$true] %s440
          %443 = dma.vmem_to_hbm [thread:$0]  %s441, 128, %s438, %s427
        $region52: #{tpu_custom_call.1} parent=39 // pred_fallthru
          _
      $region40: #{tpu_custom_call.1} parent=5 // pred_fallthru
        _
      %p444 = scmp.le.s32.totalorder 2, %s14
      // Predicated region
      $region53: #{tpu_custom_call.1} parent=5 // pred_check
        %p445 = pneg %p444
      $region54: #{tpu_custom_call.1} parent=5 // pred_check_branch
        %447 = sbr.rel (%p445) target = $region56
      $region55: #{tpu_custom_call.1} parent=5 // pred_region
        %s448 = ssub.s32 %s14, 2
        // Predicated region
        $region57: #{tpu_custom_call.1} parent=55 // pred_check
          %p449 = pneg %p165
        $region58: #{tpu_custom_call.1} parent=55 // pred_check_branch
          %451 = sbr.rel (%p449) target = $region60
        $region59: #{tpu_custom_call.1} parent=55 // pred_region
          %s452 = sand.u32 %s150, 1
          %s453 = scalar_lea.sflag [#allocation4], %s452
          %s454 = sand.u32 %s150, 1
          %s455 = smul.addr %s454, 8
          %s456 = scalar_lea.vmem [#allocation3], %s455
          %457 = dma.done %s453, 128
        $region60: #{tpu_custom_call.1} parent=55 // pred_fallthru
          _
      $region56: #{tpu_custom_call.1} parent=5 // pred_fallthru
        _
    $region6: #{tpu_custom_call.1} parent=1 // loop_footer
      %s18 = sadd.s32 1, %s14
    $region7: #{tpu_custom_call.1} parent=1 // loop_footer_branch
      %13 = sbr.rel target = $region3
    $region8: #{tpu_custom_call.1} parent=1 // loop_exit
      _
    %458 = vsyncpa [#allocation4], 1
    %s459 = scalar_lea.sflag [#allocation4], 1
    %460 = vsyncpa %s459, 1

</llo_original>
